<compile_context>
chip_gen: v6e
topology: v6e:2x2x1
jax: 0.10.0
libtpu: 0.0.40
codegen_flags: <defaults>
</compile_context>

<pallas_src>
import functools

import jax
import jax.numpy as jnp
from jax.experimental import pallas as pl
from jax.experimental.pallas import tpu as pltpu


def _round_up(v, m):
    return (v + m - 1) // m * m


def _logistic_kernel(x_ref, wt_ref, b_ref, o_ref, *, approx):
    # x_ref: (tb, Din), wt_ref: (Din, tn), b_ref: (1, tn), o_ref: (tb, tn)
    z = jnp.dot(x_ref[...], wt_ref[...], preferred_element_type=jnp.float32)
    z = z + b_ref[...]                       # f32 bias add (broadcast over rows)
    e = jnp.exp(-z)                          # EUP
    o_ref[...] = pl.reciprocal(1.0 + e, approx=approx).astype(o_ref.dtype)


def prepare_params(weight, bias, *, compute_dtype=None,
                   weight_vmem_budget=24 * 1024 * 1024):
    """One-time parameter prep (do NOT call per forward).

    weight: (Dout, Din) — PyTorch nn.Linear layout.  bias: (Dout,).
    Transposes to (Din, Dout), optionally casts (e.g. bf16 for v6e/v7x MXU),
    and pads Dout only if the weight is large enough to require Dout tiling.
    """
    out_dim, in_dim = weight.shape
    w_dtype = jnp.dtype(compute_dtype) if compute_dtype is not None else weight.dtype
    w_bytes = w_dtype.itemsize

    if in_dim * out_dim * w_bytes <= weight_vmem_budget:
        tn, dout_p = out_dim, out_dim        # full-width weight block, no padding
    else:
        dout_p = _round_up(out_dim, 128)
        tn = 128
        for cand in (1024, 512, 256, 128):
            if dout_p % cand == 0 and in_dim * cand * w_bytes <= weight_vmem_budget:
                tn = cand
                break

    wt = weight.T.astype(w_dtype)            # (Din, Dout)
    b2 = bias.astype(jnp.float32).reshape(1, out_dim)
    if dout_p != out_dim:
        wt = jnp.zeros((in_dim, dout_p), w_dtype).at[:, :out_dim].set(wt)
        b2 = jnp.zeros((1, dout_p), jnp.float32).at[:, :out_dim].set(b2)

    return {"wt": wt, "b": b2, "tn": tn, "out_dim": out_dim, "in_dim": in_dim}


def _choose_tb(batch, block_batch):
    """Pick a batch tile: >=2 blocks when there is enough work (v7x's two
    TensorCores) and preferably a tile that divides the batch (no dead rows)."""
    b8 = _round_up(batch, 8)
    if b8 <= 16:
        return batch, batch                  # single full-dim block, no padding
    target = min(block_batch, _round_up(-(-b8 // 2), 8))
    tb = target
    while tb > 32 and b8 % tb != 0:
        tb -= 8                              # prefer an evenly dividing tile
    if b8 % tb != 0:
        tb = target                          # fall back: small padded tail
    return tb, _round_up(batch, tb)


def logistic_forward(x, params, *, block_batch=256, approx_sigmoid=True):
    """sigmoid(x @ W.T + b) for params produced by prepare_params()."""
    wt, b2 = params["wt"], params["b"]
    tn, out_dim, in_dim = params["tn"], params["out_dim"], params["in_dim"]
    batch = x.shape[0]
    assert x.shape[1] == in_dim
    dout_p = wt.shape[1]
    out_dtype = x.dtype

    xk = x.astype(wt.dtype) if x.dtype != wt.dtype else x
    tb, b_p = _choose_tb(batch, block_batch)
    if b_p != batch:
        xk = jnp.zeros((b_p, in_dim), xk.dtype).at[:batch].set(xk)

    nb, nd = b_p // tb, dout_p // tn
    weight_resident = (nd == 1 and nb > 1)   # grid-invariant weight/bias blocks

    x_spec = pl.BlockSpec((tb, in_dim), lambda i, j: (i, 0))
    o_spec = pl.BlockSpec((tb, tn), lambda i, j: (i, j))
    if weight_resident:
        w_spec = pl.BlockSpec((in_dim, tn), lambda i, j: (0, j),
                              pipeline_mode=pl.Buffered(1))
        b_spec = pl.BlockSpec((1, tn), lambda i, j: (0, j),
                              pipeline_mode=pl.Buffered(1))
        w_bufs = 1
    else:
        w_spec = pl.BlockSpec((in_dim, tn), lambda i, j: (0, j))
        b_spec = pl.BlockSpec((1, tn), lambda i, j: (0, j))
        w_bufs = 2

    # Scoped-VMEM limit from the actual tile sizes (+50% slack), clamped to
    # [32 MiB default, 64 MiB = smallest physical VMEM across v5e/v6e/v7x].
    est = (2 * tb * in_dim * xk.dtype.itemsize
           + w_bufs * in_dim * tn * wt.dtype.itemsize
           + w_bufs * tn * b2.dtype.itemsize
           + 2 * tb * tn * jnp.dtype(out_dtype).itemsize)
    vmem_limit = int(min(max(est * 3 // 2 + (1 << 20), 32 << 20), 64 << 20))

    bytes_accessed = (batch * in_dim * xk.dtype.itemsize
                      + in_dim * dout_p * wt.dtype.itemsize
                      + dout_p * b2.dtype.itemsize
                      + batch * out_dim * jnp.dtype(out_dtype).itemsize)

    out = pl.pallas_call(
        functools.partial(_logistic_kernel, approx=approx_sigmoid),
        out_shape=jax.ShapeDtypeStruct((b_p, dout_p), out_dtype),
        grid=(nb, nd),
        in_specs=[x_spec, w_spec, b_spec],
        out_specs=o_spec,
        compiler_params=pltpu.CompilerParams(
            dimension_semantics=("parallel", "parallel"),
            vmem_limit_bytes=vmem_limit,
        ),
        cost_estimate=pl.CostEstimate(
            flops=2 * batch * in_dim * out_dim,
            transcendentals=batch * out_dim,
            bytes_accessed=bytes_accessed,
        ),
    )(xk, wt, b2)

    if b_p != batch or dout_p != out_dim:
        out = out[:batch, :out_dim]
    return out


def init_params(key, input_dim, output_dim):
    kw, kb = jax.random.split(key)
    # xavier_uniform_ with gain=1.0: U(-a, a), a = sqrt(6 / (fan_in + fan_out))
    a = (6.0 / (input_dim + output_dim)) ** 0.5
    weight = jax.random.uniform(
        kw, (output_dim, input_dim), minval=-a, maxval=a, dtype=jnp.float32
    )
    # nn.Linear default bias init: U(-1/sqrt(fan_in), 1/sqrt(fan_in))
    bb = 1.0 / (input_dim ** 0.5)
    bias = jax.random.uniform(
        kb, (output_dim,), minval=-bb, maxval=bb, dtype=jnp.float32
    )
    return weight, bias


if __name__ == "__main__":
    key = jax.random.PRNGKey(0)
    kx, kp = jax.random.split(key)

    batch = 8
    input_dim = 32
    output_dim = 16

    x = jax.random.normal(kx, (batch, input_dim), dtype=jnp.float32)
    weight, bias = init_params(kp, input_dim, output_dim)

    # Plain-JAX reference
    ref = 1.0 / (1.0 + jnp.exp(-(x @ weight.T + bias)))

    # f32-input path (weight prepped once; approx-EUP reciprocal epilogue)
    params_f32 = prepare_params(weight, bias)
    out = jax.block_until_ready(logistic_forward(x, params_f32))
    assert out.shape == (batch, output_dim)
    assert jnp.allclose(out, ref, atol=5e-3, rtol=5e-3)

    # bf16 matmul path (v6e/v7x MXU-native), f32 accumulation + f32 epilogue
    params_bf16 = prepare_params(weight, bias, compute_dtype=jnp.bfloat16)
    out_bf = jax.block_until_ready(logistic_forward(x, params_bf16))
    assert out_bf.shape == (batch, output_dim)
    assert jnp.allclose(out_bf, ref, atol=2e-2, rtol=2e-2)

    print("KERNEL_OK")
</pallas_src>

<mosaic_0001>
module attributes {stable_mosaic.version = 11 : i64} {
  func.func @_logistic_kernel(%arg0: i32, %arg1: i32, %arg2: memref<8x32xf32, #tpu.memory_space<vmem>>, %arg3: memref<32x16xf32, #tpu.memory_space<vmem>>, %arg4: memref<1x16xf32, #tpu.memory_space<vmem>>, %arg5: memref<8x16xf32, #tpu.memory_space<vmem>>) attributes {dimension_semantics = [#tpu.dimension_semantics<parallel>, #tpu.dimension_semantics<parallel>], iteration_bounds = array<i64: 1, 1>, scalar_prefetch = 0 : i64, scratch_operands = 0 : i64, tpu.core_type = #tpu.core_type<tc>, window_params = [{transform_indices = @transform_0, window_bounds = array<i64: 8, 32>}, {transform_indices = @transform_1, window_bounds = array<i64: 32, 16>}, {transform_indices = @transform_2, window_bounds = array<i64: 1, 16>}, {transform_indices = @transform_3, window_bounds = array<i64: 8, 16>}]} {
    %c0 = arith.constant 0 : index
    %c0_0 = arith.constant 0 : index
    %0 = vector.load %arg2[%c0, %c0_0] : memref<8x32xf32, #tpu.memory_space<vmem>>, vector<8x32xf32>
    %c0_1 = arith.constant 0 : index
    %c0_2 = arith.constant 0 : index
    %1 = vector.load %arg3[%c0_1, %c0_2] : memref<32x16xf32, #tpu.memory_space<vmem>>, vector<32x16xf32>
    %cst = arith.constant dense<0.000000e+00> : vector<8x16xf32>
    %2 = tpu.matmul %0, %1, %cst {dimension_numbers = #tpu.dot_dimension_numbers<[1], [0], [0], [1], [0, 0, 1, 1], [], []>} : vector<8x32xf32>, vector<32x16xf32>, vector<8x16xf32> -> vector<8x16xf32>
    %c0_3 = arith.constant 0 : index
    %c0_4 = arith.constant 0 : index
    %3 = vector.load %arg4[%c0_3, %c0_4] : memref<1x16xf32, #tpu.memory_space<vmem>>, vector<1x16xf32>
    %4 = vector.broadcast %3 : vector<1x16xf32> to vector<8x16xf32>
    %5 = arith.addf %2, %4 : vector<8x16xf32>
    %cst_5 = arith.constant 0.000000e+00 : f32
    %6 = vector.broadcast %cst_5 : f32 to vector<8x16xf32>
    %7 = arith.subf %6, %5 : vector<8x16xf32>
    %8 = math.exp %7 : vector<8x16xf32>
    %cst_6 = arith.constant 1.000000e+00 : f32
    %9 = vector.broadcast %cst_6 : f32 to vector<8x16xf32>
    %10 = arith.addf %9, %8 : vector<8x16xf32>
    %11 = tpu.reciprocal %10 {approx = true} : vector<8x16xf32> -> vector<8x16xf32>
    %c0_7 = arith.constant 0 : index
    %c0_8 = arith.constant 0 : index
    %12 = vector.load %arg5[%c0_7, %c0_8] : memref<8x16xf32, #tpu.memory_space<vmem>>, vector<8x16xf32>
    tpu.vector_store %arg5[%c0_7, %c0_8], %11 {strides = array<i32>} : memref<8x16xf32, #tpu.memory_space<vmem>>, vector<8x16xf32>,
    return
  }
  func.func @transform_0(%arg0: i32, %arg1: i32) -> (i32, i32) {
    %c0_i32 = arith.constant 0 : i32
    %c0_i32_0 = arith.constant 0 : i32
    return %arg0, %c0_i32 : i32, i32
  }
  func.func @transform_1(%arg0: i32, %arg1: i32) -> (i32, i32) {
    %c0_i32 = arith.constant 0 : i32
    %c0_i32_0 = arith.constant 0 : i32
    return %c0_i32, %arg1 : i32, i32
  }
  func.func @transform_2(%arg0: i32, %arg1: i32) -> (i32, i32) {
    %c0_i32 = arith.constant 0 : i32
    %c0_i32_0 = arith.constant 0 : i32
    return %c0_i32, %arg1 : i32, i32
  }
  func.func @transform_3(%arg0: i32, %arg1: i32) -> (i32, i32) {
    %c0_i32 = arith.constant 0 : i32
    return %arg0, %arg1 : i32, i32
  }
}

</mosaic_0001>

<llo_original>
// kernel: tpu_custom_call.1
$region0: #{tpu_custom_call.1}
  #allocation0 [shape = 'u32[]', space=smem, size = 0x4, offset = 0x4, fixed_abs, tag = 'smem constant byte address 0x4 - core index']
  #allocation1 [shape = 'u32[144,128]{1,0:T(1,128)}', space=vmem, size = 0x12000, scoped, tag = 'internal scratch']
  %s0 = inlined_call_operand.vmem [shape: f32[8,32], index: 0, kind: input, shape index: {}]
  %s1 = inlined_call_operand.vmem [shape: f32[32,16], index: 1, kind: input, shape index: {}]
  %s2 = inlined_call_operand.vmem [shape: f32[1,16], index: 2, kind: input, shape index: {}]
  %s3 = inlined_call_operand.hbm [shape: f32[8,16], index: 3, kind: output, shape index: {}]
  %s4 = sld [smem:[#allocation0]]
  $region22: #{tpu_custom_call.1} parent=0
    _
  %s6 = ssub.s32 1, %s4
  %s7 = scalar_select 0, %s6, %s4
  $region1: #{tpu_custom_call.1} parent=0
    #allocation2 [shape = 'u8[4096]{0}', space=vmem, size = 0x1000, scoped, tag = 'output window, operand 0, single buffered']
    #allocation3 [shape = 's32[1]{0}', space=sflag, size = 0x4, scoped, tag = 'scoped memory for tpu_custom_call.1']
    %8 = vsyncpa [#allocation3], 0
    // Predicated region
    $region2: #{tpu_custom_call.1} parent=1 // pred_check
      _
    $region3: #{tpu_custom_call.1} parent=1 // pred_check_branch
      %10 = sbr.rel (0) target = $region5
    $region4: #{tpu_custom_call.1} parent=1 // pred_region
      _
    $region5: #{tpu_custom_call.1} parent=1 // pred_fallthru
      _
    // Predicated region
    $region6: #{tpu_custom_call.1} parent=1 // pred_check
      _
    $region7: #{tpu_custom_call.1} parent=1 // pred_check_branch
      %12 = sbr.rel (0) target = $region9
    $region8: #{tpu_custom_call.1} parent=1 // pred_region
      _
    $region9: #{tpu_custom_call.1} parent=1 // pred_fallthru
      _
    // Predicated region
    $region10: #{tpu_custom_call.1} parent=1 // pred_check
      _
    $region11: #{tpu_custom_call.1} parent=1 // pred_check_branch
      %14 = sbr.rel (0) target = $region13
    $region12: #{tpu_custom_call.1} parent=1 // pred_region
      _
    $region13: #{tpu_custom_call.1} parent=1 // pred_fallthru
      _
    %v15 = vld [vmem:[%s0] sm:$0xff]
    %v16 = vld [vmem:[%s1] sm:$0xff]
    %v17 = vld [vmem:[%s1 + $0x8] sm:$0xff]
    %v18 = vld [vmem:[%s1 + $0x10] sm:$0xff]
    %v19 = vld [vmem:[%s1 + $0x18] sm:$0xff]
    %v20 = vld [vmem:[%s2] sm:$0x1]
    %v22 = vlaneseq
    %v23 = vshrl.u32 %v22, 7
    %v24 = vsub.s32 0, %v23
    %v25 = vrot.slane %v20, %v24
    %vm27 = vcmask 261120
    %v29 = vsel %vm27, %v15, 0
    %31 = vmatprep.subr.mxu0 0.0
    %32 = vmatpush1.msra.mxu0 0.0
    %33 = vmatprep.subr.mxu0 0.0
    %34 = vmatpush1.msra.mxu0 0.0
    %35 = vmatprep.subr.mxu0 0.0
    %36 = vmatpush1.msra.mxu0 0.0
    %37 = vmatprep.subr.mxu0 0.0
    %38 = vmatpush1.msra.mxu0 0.0
    %39 = vmatprep.subr.mxu0 0.0
    %40 = vmatpush1.msra.mxu0 0.0
    %41 = vmatprep.subr.mxu0 0.0
    %42 = vmatpush1.msra.mxu0 0.0
    %43 = vmatprep.subr.mxu0 0.0
    %44 = vmatpush1.msra.mxu0 0.0
    %45 = vmatprep.subr.mxu0 0.0
    %46 = vmatpush1.msra.mxu0 0.0
    %47 = vmatprep.subr.mxu0 0.0
    %48 = vmatpush1.msra.mxu0 0.0
    %49 = vmatprep.subr.mxu0 0.0
    %50 = vmatpush1.msra.mxu0 0.0
    %51 = vmatprep.subr.mxu0 0.0
    %52 = vmatpush1.msra.mxu0 0.0
    %53 = vmatprep.subr.mxu0 0.0
    %54 = vmatpush1.msra.mxu0 0.0
    %55 = vmatprep.subr.mxu0 0.0
    %56 = vmatpush1.msra.mxu0 %v19
    %57 = vmatprep.subr.mxu0 0.0
    %58 = vmatpush1.msra.mxu0 %v18
    %59 = vmatprep.subr.mxu0 0.0
    %60 = vmatpush1.msra.mxu0 %v17
    %61 = vmatprep.subr.mxu0 0.0
    %62 = vmatpush1.msra.mxu0 %v16
    %63 = vmatprep.subr.mxu0 0.0
    %64 = vmatpush2.msra.mxu0 0.0
    %65 = vmatprep.subr.mxu0 0.0
    %66 = vmatpush2.msra.mxu0 0.0
    %67 = vmatprep.subr.mxu0 0.0
    %68 = vmatpush2.msra.mxu0 0.0
    %69 = vmatprep.subr.mxu0 0.0
    %70 = vmatpush2.msra.mxu0 0.0
    %71 = vmatprep.subr.mxu0 0.0
    %72 = vmatpush2.msra.mxu0 0.0
    %73 = vmatprep.subr.mxu0 0.0
    %74 = vmatpush2.msra.mxu0 0.0
    %75 = vmatprep.subr.mxu0 0.0
    %76 = vmatpush2.msra.mxu0 0.0
    %77 = vmatprep.subr.mxu0 0.0
    %78 = vmatpush2.msra.mxu0 0.0
    %79 = vmatprep.subr.mxu0 0.0
    %80 = vmatpush2.msra.mxu0 0.0
    %81 = vmatprep.subr.mxu0 0.0
    %82 = vmatpush2.msra.mxu0 0.0
    %83 = vmatprep.subr.mxu0 0.0
    %84 = vmatpush2.msra.mxu0 0.0
    %85 = vmatprep.subr.mxu0 0.0
    %86 = vmatpush2.msra.mxu0 0.0
    %87 = vmatprep.subr.mxu0 0.0
    %88 = vmatpush2.msra.mxu0 0.0
    %89 = vmatprep.subr.mxu0 0.0
    %90 = vmatpush2.msra.mxu0 0.0
    %91 = vmatprep.subr.mxu0 0.0
    %92 = vmatpush2.msra.mxu0 0.0
    %93 = vmatprep.subr.mxu0 0.0
    %94 = vmatpush2.msra.mxu0 0.0
    %95 = vmatprep.mubr.f32.mxu0 0.0
    %96 = vmatmul.mubr.f32.gmra.mxu0 %v29
    %v97 = vpop.f32.mrf.mxu0
    %v98 = vadd.f32 %v25, %v97
    %v99 = vpop.f32.mrf.mxu0
    %100 = vdwg.mxu0
    %v101 = vsub.f32 0.0, %v98
    %v102 = vmul.f32 %v101, 1.442695
    %v103 = vpow.pop %v102
    %v104 = vadd.f32 %v103, 1.0
    %v105 = vrcp.pop %v104
    %vm106 = vcmask 130048
    %107 = vst.msk [vmem:[#allocation2] sm:$0xff] %vm106, %v105
    // Predicated region
    $region14: #{tpu_custom_call.1} parent=1 // pred_check
      _
    $region15: #{tpu_custom_call.1} parent=1 // pred_check_branch
      %109 = sbr.rel (0) target = $region17
    $region16: #{tpu_custom_call.1} parent=1 // pred_region
      %s111 = ssub.s32 128, 128
      %112 = vsyncadd [#allocation3], %s111
      %s114 = sshll.u32 [#allocation2], 4
      %s115 = int_to_ptr.vmem [resolvable:$true] %s114
      %117 = dma.vmem_to_hbm [thread:$0]  %s115, 128, %s3, [#allocation3]
    $region17: #{tpu_custom_call.1} parent=1 // pred_fallthru
      _
    // Predicated region
    $region18: #{tpu_custom_call.1} parent=1 // pred_check
      _
    $region19: #{tpu_custom_call.1} parent=1 // pred_check_branch
      %119 = sbr.rel (0) target = $region21
    $region20: #{tpu_custom_call.1} parent=1 // pred_region
      %120 = dma.done [#allocation3], 128
    $region21: #{tpu_custom_call.1} parent=1 // pred_fallthru
      _
    %121 = vsyncpa [#allocation3], 1

</llo_original>
